<compile_context>
chip_gen: v7x
topology: tpu7x:2x2x1
jax: 0.10.0
libtpu: 0.0.40
codegen_flags: <defaults>
</compile_context>

<pallas_src>
import functools

import jax
import jax.numpy as jnp
from jax.experimental import pallas as pl
from jax.experimental.pallas import tpu as pltpu


# ---------------------------------------------------------------------------
# Hardware introspection (best effort; conservative fallbacks).
# ---------------------------------------------------------------------------
def _tpu_info():
    try:
        return pltpu.get_tpu_info()
    except Exception:
        return None


def _vmem_capacity_bytes():
    info = _tpu_info()
    if info is not None:
        for attr in ("vmem_capacity_bytes", "vmem_bytes", "vmem_size_bytes"):
            v = getattr(info, attr, None)
            if isinstance(v, int) and v > 0:
                return v
    return 64 * 1024 * 1024  # conservative fallback: v7x physical VMEM


def _num_tensorcores():
    info = _tpu_info()
    if info is not None:
        for attr in ("num_tensorcores", "tensorcores_per_chip", "num_cores",
                     "cores_per_chip"):
            v = getattr(info, attr, None)
            if isinstance(v, int) and v > 0:
                return v
    return 1  # conservative fallback: v5e / v6e (1 TensorCore per chip)


# ---------------------------------------------------------------------------
# Kernel
# ---------------------------------------------------------------------------
def _label_smoothing_kernel(x_ref, t_ref, out_ref, acc_ref, *,
                            confidence, off_value, n_rows):
    """One grid step: (tile_n, C) logits tile + (tile_n, 1) int32 targets.

    Accumulates per-row losses into a persistent (tile_n, 1) VMEM scratch;
    the cross-row reduce + store happens only in the last-step epilogue.
    """
    c = pl.program_id(0)          # TensorCore split axis ("parallel")
    i = pl.program_id(1)          # batch reduction axis ("arbitrary")
    steps = pl.num_programs(1)
    tile_n, num_c = x_ref.shape

    @pl.when(i == 0)
    def _():
        acc_ref[...] = jnp.zeros_like(acc_ref)

    x = x_ref[...].astype(jnp.float32)                          # (tile_n, C)
    col = jax.lax.broadcasted_iota(jnp.int32, (tile_n, num_c), 1)

    # log_softmax pieces (dim=1 of the PyTorch module)
    m = jnp.max(x, axis=1, keepdims=True)                        # (tile_n, 1)
    shifted = x - m
    lse = jnp.log(jnp.sum(jnp.exp(shifted), axis=1, keepdims=True))

    # Fused weighted reduction:
    #   loss_row = -sum_c smooth_c * logp_c
    #            = lse * sum_c smooth_c - sum_c smooth_c * shifted_c
    #            = lse - sum_c w_c * shifted_c   (sum_c smooth_c == 1.0)
    tgt = t_ref[...]                                             # (tile_n, 1)
    w = jnp.where(col == tgt, confidence, off_value)
    per_row = lse - jnp.sum(w * shifted, axis=1, keepdims=True)

    # Unconditional row mask: boundary blocks read garbage past row N; the
    # select keeps any NaN/Inf in those rows from reaching the accumulator.
    row = jax.lax.broadcasted_iota(jnp.int32, (tile_n, 1), 0)
    global_row = (c * steps + i) * tile_n + row
    per_row = jnp.where(global_row < n_rows, per_row, 0.0)

    acc_ref[...] += per_row                                      # deferred reduce

    @pl.when(i == steps - 1)
    def _():
        # this core's partial batch-sum, broadcast over a lane-dense block
        out_ref[...] = (jnp.zeros(out_ref.shape, out_ref.dtype)
                        + jnp.sum(acc_ref[...]))


# ---------------------------------------------------------------------------
# Wrapper
# ---------------------------------------------------------------------------
def label_smoothing_loss(inputs, targets, *, num_classes, smoothing=0.1,
                         tile_n=None):
    """inputs: (N, C) float logits; targets: (N,) int class ids. Returns scalar."""
    N, C = inputs.shape
    assert C == num_classes

    confidence = 1.0 - smoothing
    off_value = smoothing / (num_classes - 1)

    itemsize = jnp.dtype(inputs.dtype).itemsize
    sublane = 16 if itemsize == 2 else 8
    c_vmem = max(128, pl.cdiv(C, 128) * 128)      # VMEM lane footprint per row

    # Generation-aware VMEM budget (v7x: 64 MiB physical; v5e/v6e: 128 MiB).
    vmem_cap = _vmem_capacity_bytes()
    vmem_limit = min(int(vmem_cap * 0.6), 100 * 1024 * 1024)

    if tile_n is None:
        # Conservative per-row VMEM: 2x double-buffered input + ~4 f32 temps
        # + lane-padded (tile_n,1) targets (2 buffers) + (tile_n,1) accumulator.
        row_bytes = (2 * c_vmem * itemsize          # input (double-buffered)
                     + 4 * c_vmem * 4               # f32 temporaries
                     + 2 * 128 * 4                  # targets block (lane-padded)
                     + 128 * 4)                     # accumulator scratch
        tile_n = max(sublane, int((vmem_limit * 0.6) // row_bytes))
    tile_n = max(sublane, (tile_n // sublane) * sublane)
    if tile_n >= N:
        tile_n = N      # single block covering everything (block == full dim)

    n_blocks = pl.cdiv(N, tile_n)
    # Only split the batch reduction across cores when the chip has 2 TCs (v7x).
    num_cores = 2 if (n_blocks >= 2 and _num_tensorcores() >= 2) else 1
    steps = pl.cdiv(n_blocks, num_cores)

    t2d = targets.astype(jnp.int32).reshape(N, 1)

    def block_idx(c, i):
        # Clamp so a 2-core split with odd n_blocks never indexes past the
        # array; the unclamped logical row index still masks those rows to 0.
        return (jnp.minimum(c * steps + i, n_blocks - 1), 0)

    kernel = functools.partial(
        _label_smoothing_kernel,
        confidence=confidence, off_value=off_value, n_rows=N)

    out = pl.pallas_call(
        kernel,
        out_shape=jax.ShapeDtypeStruct((num_cores, 8, 128), jnp.float32),
        grid_spec=pltpu.PrefetchScalarGridSpec(
            num_scalar_prefetch=0,
            grid=(num_cores, steps),
            in_specs=[
                pl.BlockSpec((tile_n, C), block_idx),   # last dim == full C
                pl.BlockSpec((tile_n, 1), block_idx),
            ],
            out_specs=pl.BlockSpec((1, 8, 128), lambda c, i: (c, 0, 0)),
            scratch_shapes=[pltpu.VMEM((tile_n, 1), jnp.float32)],
        ),
        compiler_params=pltpu.CompilerParams(
            dimension_semantics=("parallel", "arbitrary"),
            vmem_limit_bytes=vmem_limit,
        ),
    )(inputs, t2d)

    # per-core partial sums live at [:, 0, 0]; finish the mean here.
    return jnp.sum(out[:, 0, 0]) / N


# ---------------------------------------------------------------------------
# Reference + self-test
# ---------------------------------------------------------------------------
def _reference(inputs, targets, num_classes, smoothing=0.1):
    confidence = 1.0 - smoothing
    log_probs = jax.nn.log_softmax(inputs.astype(jnp.float32), axis=1)
    one_hot = jax.nn.one_hot(targets, num_classes, dtype=jnp.float32)
    smooth = one_hot * confidence + (1.0 - one_hot) * smoothing / (num_classes - 1)
    return jnp.mean(jnp.sum(-smooth * log_probs, axis=1))


if __name__ == "__main__":
    num_classes = 10
    batch = 20          # deliberately not a multiple of 8 -> exercises row masking
    smoothing = 0.1

    key = jax.random.PRNGKey(0)
    k1, k2 = jax.random.split(key)
    logits = jax.random.normal(k1, (batch, num_classes), dtype=jnp.float32)
    targets = jax.random.randint(k2, (batch,), 0, num_classes, dtype=jnp.int32)

    ref = _reference(logits, targets, num_classes, smoothing)

    # auto-sized tile (single block)
    loss_a = label_smoothing_loss(logits, targets, num_classes=num_classes,
                                  smoothing=smoothing)
    loss_a = jax.block_until_ready(loss_a)
    assert jnp.allclose(loss_a, ref, atol=1e-5, rtol=1e-5), (loss_a, ref)

    # small forced tile -> multi-block grid, boundary-block row masking
    loss_b = label_smoothing_loss(logits, targets, num_classes=num_classes,
                                  smoothing=smoothing, tile_n=8)
    loss_b = jax.block_until_ready(loss_b)
    assert jnp.allclose(loss_b, ref, atol=1e-5, rtol=1e-5), (loss_b, ref)

    print("KERNEL_OK")
</pallas_src>

<mosaic_0001>
module attributes {stable_mosaic.version = 11 : i64} {
  func.func @_label_smoothing_kernel(%arg0: i32, %arg1: i32, %arg2: memref<20x10xf32, #tpu.memory_space<vmem>>, %arg3: memref<20x1xi32, #tpu.memory_space<vmem>>, %arg4: memref<1x8x128xf32, #tpu.memory_space<vmem>>, %arg5: memref<20x1xf32, #tpu.memory_space<vmem>>) attributes {dimension_semantics = [#tpu.dimension_semantics<parallel>, #tpu.dimension_semantics<arbitrary>], iteration_bounds = array<i64: 1, 1>, scalar_prefetch = 0 : i64, scratch_operands = 1 : i64, tpu.core_type = #tpu.core_type<tc>, window_params = [{transform_indices = @transform_0, window_bounds = array<i64: 20, 10>}, {transform_indices = @transform_1, window_bounds = array<i64: 20, 1>}, {transform_indices = @transform_2, window_bounds = array<i64: 1, 8, 128>}]} {
    %c0_i32 = arith.constant 0 : i32
    %0 = arith.cmpi eq, %arg1, %c0_i32 : i32
    %1 = arith.extui %0 : i1 to i32
    %c0_i32_0 = arith.constant 0 : i32
    %2 = arith.cmpi ne, %1, %c0_i32_0 : i32
    scf.if %2 {
      %cst_16 = arith.constant 0.000000e+00 : f32
      %39 = vector.broadcast %cst_16 : f32 to vector<20x1xf32>
      %c0_17 = arith.constant 0 : index
      %c0_18 = arith.constant 0 : index
      %40 = vector.load %arg5[%c0_17, %c0_18] : memref<20x1xf32, #tpu.memory_space<vmem>>, vector<20x1xf32>
      tpu.vector_store %arg5[%c0_17, %c0_18], %39 {strides = array<i32>} : memref<20x1xf32, #tpu.memory_space<vmem>>, vector<20x1xf32>,
    } else {
    }
    %c0 = arith.constant 0 : index
    %c0_1 = arith.constant 0 : index
    %3 = vector.load %arg2[%c0, %c0_1] : memref<20x10xf32, #tpu.memory_space<vmem>>, vector<20x10xf32>
    %4 = tpu.iota {dimensions = array<i32: 1>} : vector<20x10xi32>
    %cst = arith.constant dense<0xFF800000> : vector<20xf32>
    %5 = vector.multi_reduction <maximumf>, %3, %cst [1] : vector<20x10xf32> to vector<20xf32>
    %6 = vector.shape_cast %5 : vector<20xf32> to vector<20x1xf32>
    %7 = vector.broadcast %6 : vector<20x1xf32> to vector<20x10xf32>
    %8 = arith.subf %3, %7 : vector<20x10xf32>
    %9 = math.exp %8 : vector<20x10xf32>
    %cst_2 = arith.constant dense<0.000000e+00> : vector<20xf32>
    %10 = vector.multi_reduction <add>, %9, %cst_2 [1] : vector<20x10xf32> to vector<20xf32>
    %11 = vector.shape_cast %10 : vector<20xf32> to vector<20x1xf32>
    %12 = math.log %11 : vector<20x1xf32>
    %c0_3 = arith.constant 0 : index
    %c0_4 = arith.constant 0 : index
    %13 = vector.load %arg3[%c0_3, %c0_4] : memref<20x1xi32, #tpu.memory_space<vmem>>, vector<20x1xi32>
    %14 = vector.broadcast %13 : vector<20x1xi32> to vector<20x10xi32>
    %15 = arith.cmpi eq, %4, %14 : vector<20x10xi32>
    %cst_5 = arith.constant 0.899999976 : f32
    %cst_6 = arith.constant 0.0111111114 : f32
    %16 = vector.broadcast %cst_5 : f32 to vector<20x10xf32>
    %17 = vector.broadcast %cst_6 : f32 to vector<20x10xf32>
    %18 = arith.select %15, %16, %17 : vector<20x10xi1>, vector<20x10xf32>
    %19 = arith.mulf %18, %8 : vector<20x10xf32>
    %cst_7 = arith.constant dense<0.000000e+00> : vector<20xf32>
    %20 = vector.multi_reduction <add>, %19, %cst_7 [1] : vector<20x10xf32> to vector<20xf32>
    %21 = vector.shape_cast %20 : vector<20xf32> to vector<20x1xf32>
    %22 = arith.subf %12, %21 : vector<20x1xf32>
    %23 = tpu.iota {dimensions = array<i32: 0>} : vector<20x1xi32>
    %c1_i32 = arith.constant 1 : i32
    %24 = arith.muli %arg0, %c1_i32 : i32
    %25 = arith.addi %24, %arg1 : i32
    %c20_i32 = arith.constant 20 : i32
    %26 = arith.muli %25, %c20_i32 : i32
    %27 = vector.broadcast %26 : i32 to vector<20x1xi32>
    %28 = arith.addi %27, %23 : vector<20x1xi32>
    %c20_i32_8 = arith.constant 20 : i32
    %29 = vector.broadcast %c20_i32_8 : i32 to vector<20x1xi32>
    %30 = arith.cmpi slt, %28, %29 : vector<20x1xi32>
    %cst_9 = arith.constant 0.000000e+00 : f32
    %31 = vector.broadcast %cst_9 : f32 to vector<20x1xf32>
    %32 = arith.select %30, %22, %31 : vector<20x1xi1>, vector<20x1xf32>
    %c0_10 = arith.constant 0 : index
    %c0_11 = arith.constant 0 : index
    %33 = vector.load %arg5[%c0_10, %c0_11] : memref<20x1xf32, #tpu.memory_space<vmem>>, vector<20x1xf32>
    %34 = arith.addf %33, %32 : vector<20x1xf32>
    %c0_12 = arith.constant 0 : index
    %c0_13 = arith.constant 0 : index
    %35 = vector.load %arg5[%c0_12, %c0_13] : memref<20x1xf32, #tpu.memory_space<vmem>>, vector<20x1xf32>
    tpu.vector_store %arg5[%c0_12, %c0_13], %34 {strides = array<i32>} : memref<20x1xf32, #tpu.memory_space<vmem>>, vector<20x1xf32>,
    %c0_i32_14 = arith.constant 0 : i32
    %36 = arith.cmpi eq, %arg1, %c0_i32_14 : i32
    %37 = arith.extui %36 : i1 to i32
    %c0_i32_15 = arith.constant 0 : i32
    %38 = arith.cmpi ne, %37, %c0_i32_15 : i32
    scf.if %38 {
      %cst_16 = arith.constant 0.000000e+00 : f32
      %39 = vector.broadcast %cst_16 : f32 to vector<1x8x128xf32>
      %c0_17 = arith.constant 0 : index
      %c0_18 = arith.constant 0 : index
      %40 = vector.load %arg5[%c0_17, %c0_18] : memref<20x1xf32, #tpu.memory_space<vmem>>, vector<20x1xf32>
      %41 = vector.shape_cast %40 : vector<20x1xf32> to vector<1x20x1xf32>
      %cst_19 = arith.constant dense<0.000000e+00> : vector<1xf32>
      %42 = vector.multi_reduction <add>, %41, %cst_19 [1, 2] : vector<1x20x1xf32> to vector<1xf32>
      %43 = vector.shape_cast %42 : vector<1xf32> to vector<1x1x1xf32>
      %44 = vector.extract %43[0, 0, 0] : f32 from vector<1x1x1xf32>
      %45 = vector.broadcast %44 : f32 to vector<1x8x128xf32>
      %46 = arith.addf %39, %45 : vector<1x8x128xf32>
      %c0_20 = arith.constant 0 : index
      %c0_21 = arith.constant 0 : index
      %c0_22 = arith.constant 0 : index
      %47 = vector.load %arg4[%c0_20, %c0_21, %c0_22] : memref<1x8x128xf32, #tpu.memory_space<vmem>>, vector<1x8x128xf32>
      tpu.vector_store %arg4[%c0_20, %c0_21, %c0_22], %46 {strides = array<i32>} : memref<1x8x128xf32, #tpu.memory_space<vmem>>, vector<1x8x128xf32>,
    } else {
    }
    return
  }
  func.func @transform_0(%arg0: i32, %arg1: i32) -> (i32, i32) {
    %c1_i32 = arith.constant 1 : i32
    %0 = arith.muli %arg0, %c1_i32 : i32
    %1 = arith.addi %0, %arg1 : i32
    %c0_i32 = arith.constant 0 : i32
    %2 = arith.minsi %1, %c0_i32 : i32
    %c0_i32_0 = arith.constant 0 : i32
    %c0_i32_1 = arith.constant 0 : i32
    return %2, %c0_i32_0 : i32, i32
  }
  func.func @transform_1(%arg0: i32, %arg1: i32) -> (i32, i32) {
    %c1_i32 = arith.constant 1 : i32
    %0 = arith.muli %arg0, %c1_i32 : i32
    %1 = arith.addi %0, %arg1 : i32
    %c0_i32 = arith.constant 0 : i32
    %2 = arith.minsi %1, %c0_i32 : i32
    %c0_i32_0 = arith.constant 0 : i32
    %c0_i32_1 = arith.constant 0 : i32
    return %2, %c0_i32_0 : i32, i32
  }
  func.func @transform_2(%arg0: i32, %arg1: i32) -> (i32, i32, i32) {
    %c0_i32 = arith.constant 0 : i32
    %c0_i32_0 = arith.constant 0 : i32
    %c0_i32_1 = arith.constant 0 : i32
    return %arg0, %c0_i32, %c0_i32_0 : i32, i32, i32
  }
}

</mosaic_0001>

<llo_original>
// kernel: tpu_custom_call.1
$region0: #{tpu_custom_call.1}
  #allocation0 [shape = 'u32[]', space=smem, size = 0x4, offset = 0x4, fixed_abs, tag = 'smem constant byte address 0x4 - core index']
  #allocation1 [shape = 'u32[144,128]{1,0:T(1,128)}', space=vmem, size = 0x12000, scoped, tag = 'internal scratch']
  #allocation2 [shape = 'f32[20,1]{1,0:T(8,128)}', space=vmem, size = 0x3000, scoped, tag = 'scratch operand']
  %s0 = inlined_call_operand.vmem [shape: f32[20,10], index: 0, kind: input, shape index: {}]
  %s1 = inlined_call_operand.vmem [shape: s32[20,1], index: 1, kind: input, shape index: {}]
  %s2 = inlined_call_operand.hbm [shape: f32[1,8,128], index: 2, kind: output, shape index: {}]
  %s3 = sld [smem:[#allocation0]]
  $region26: #{tpu_custom_call.1} parent=0
    _
  %s5 = ssub.s32 1, %s3
  %s6 = scalar_select 0, %s5, %s3
  $region1: #{tpu_custom_call.1} parent=0
    #allocation3 [shape = 'u8[4096]{0}', space=vmem, size = 0x1000, scoped, tag = 'output window, operand 0, single buffered']
    #allocation4 [shape = 's32[1]{0}', space=sflag, size = 0x4, scoped, tag = 'scoped memory for tpu_custom_call.1']
    %7 = vsyncpa [#allocation4], 0
    // Predicated region
    $region2: #{tpu_custom_call.1} parent=1 // pred_check
      _
    $region3: #{tpu_custom_call.1} parent=1 // pred_check_branch
      %9 = sbr.rel (0) target = $region5
    $region4: #{tpu_custom_call.1} parent=1 // pred_region
      %s10 = sadd.s32 0, 0
      %p11 = scmp.lt.s32.totalorder %s10, 0
      %s12 = scalar_select %p11, %s10, 0
      %s13 = smul.u32 3, %s12
      %p14 = scmp.lt.s32.totalorder %s13, 2
      %s15 = scalar_select %p14, %s13, 2
      %s16 = smul.addr %s15, 8
      %s17 = scalar_lea.vmem %s0, %s16
      %s18 = sadd.s32 0, 0
      %p19 = scmp.lt.s32.totalorder %s18, 0
      %s20 = scalar_select %p19, %s18, 0
      %s21 = smul.u32 3, %s20
    $region5: #{tpu_custom_call.1} parent=1 // pred_fallthru
      _
    // Predicated region
    $region6: #{tpu_custom_call.1} parent=1 // pred_check
      _
    $region7: #{tpu_custom_call.1} parent=1 // pred_check_branch
      %23 = sbr.rel (0) target = $region9
    $region8: #{tpu_custom_call.1} parent=1 // pred_region
      %s24 = sadd.s32 0, 0
      %p25 = scmp.lt.s32.totalorder %s24, 0
      %s26 = scalar_select %p25, %s24, 0
      %s27 = smul.u32 3, %s26
      %p28 = scmp.lt.s32.totalorder %s27, 2
      %s29 = scalar_select %p28, %s27, 2
      %s30 = smul.addr %s29, 8
      %s31 = scalar_lea.vmem %s1, %s30
      %s32 = sadd.s32 0, 0
      %p33 = scmp.lt.s32.totalorder %s32, 0
      %s34 = scalar_select %p33, %s32, 0
      %s35 = smul.u32 3, %s34
    $region9: #{tpu_custom_call.1} parent=1 // pred_fallthru
      _
    %s36 = sadd.s32 0, 0
    %p37 = scmp.lt.s32.totalorder %s36, 0
    %s38 = scalar_select %p37, %s36, 0
    %s39 = smul.u32 3, %s38
    %p40 = scmp.lt.s32.totalorder %s39, 2
    %s41 = scalar_select %p40, %s39, 2
    %s42 = smul.addr %s41, 8
    %s43 = scalar_lea.vmem %s0, %s42
    %s44 = sadd.s32 0, 0
    %p45 = scmp.lt.s32.totalorder %s44, 0
    %s46 = scalar_select %p45, %s44, 0
    %s47 = smul.u32 3, %s46
    %p48 = scmp.lt.s32.totalorder %s47, 2
    %s49 = scalar_select %p48, %s47, 2
    %s50 = smul.addr %s49, 8
    %s51 = scalar_lea.vmem %s1, %s50
    %s52 = sadd.s32 0, 0
    %p53 = scmp.lt.s32.totalorder %s52, 0
    %s54 = scalar_select %p53, %s52, 0
    %s55 = smul.u32 3, %s54
    %p56 = scmp.lt.s32.totalorder %s55, 2
    %s57 = scalar_select %p56, %s55, 2
    %s58 = smul.addr %s57, 8
    %s59 = scalar_lea.vmem %s0, %s58
    %s60 = sadd.s32 0, 0
    %p61 = scmp.lt.s32.totalorder %s60, 0
    %s62 = scalar_select %p61, %s60, 0
    %s63 = smul.u32 3, %s62
    %s64 = sadd.s32 0, 0
    %p65 = scmp.lt.s32.totalorder %s64, 0
    %s66 = scalar_select %p65, %s64, 0
    %s67 = smul.u32 3, %s66
    %p68 = scmp.lt.s32.totalorder %s67, 2
    %s69 = scalar_select %p68, %s67, 2
    %s70 = smul.addr %s69, 8
    %s71 = scalar_lea.vmem %s1, %s70
    %s72 = sadd.s32 0, 0
    %p73 = scmp.lt.s32.totalorder %s72, 0
    %s74 = scalar_select %p73, %s72, 0
    %s75 = smul.u32 3, %s74
    %p76 = scmp.eq.s32.totalorder 0, 0
    // Predicated region
    $region10: #{tpu_custom_call.1} parent=1 // pred_check
      %p77 = pneg %p76
    $region11: #{tpu_custom_call.1} parent=1 // pred_check_branch
      %79 = sbr.rel (%p77) target = $region13
    $region12: #{tpu_custom_call.1} parent=1 // pred_region
      %vm80 = vcmask 7168
      %81 = vst.msk [vmem:[#allocation2] sm:$0xff] %vm80, 0.0
      %82 = vst.msk [vmem:[#allocation2 + $0x8] sm:$0xff] %vm80, 0.0
      %vm83 = vcmask 3072
      %84 = vst.msk [vmem:[#allocation2 + $0x10] sm:$0xf] %vm83, 0.0
    $region13: #{tpu_custom_call.1} parent=1 // pred_fallthru
      _
    %v85 = vld [vmem:[%s59] sm:$0xff]
    %v86 = vld [vmem:[%s59 + $0x8] sm:$0xff]
    %v87 = vld [vmem:[%s59 + $0x10] sm:$0xf]
    %v88 = vlaneseq
    %v89 = vand.u32 %v88, 127
    %vm90 = vcmask 80896
    %v91 = vsel %vm90, %v85, -inf
    %92 = vmax.xlane.f32.xlu0 %v91
    %v93 = vpop.xlane.xlu0 %92
    %v94 = vsel %vm90, %v86, -inf
    %95 = vmax.xlane.f32.xlu0 %v94
    %v96 = vpop.xlane.xlu0 %95
    %vm97 = vcmask 76800
    %v98 = vsel %vm97, %v87, -inf
    %99 = vmax.xlane.f32.xlu0 %v98
    %v100 = vpop.xlane.xlu0 %99
    %v101 = vsub.f32 %v85, %v93
    %v102 = vsub.f32 %v86, %v96
    %v103 = vsub.f32 %v87, %v100
    %v104 = vmul.f32 %v101, 1.442695
    %v105 = vpow.pop %v104
    %v106 = vmul.f32 %v102, 1.442695
    %v107 = vpow.pop %v106
    %v108 = vmul.f32 %v103, 1.442695
    %v109 = vpow.pop %v108
    %v110 = vsel %vm90, %v105, 0.0
    %111 = vadd.xlane.f32.xlu0 %v110
    %v112 = vpop.xlane.xlu0 %111
    %v113 = vsel %vm90, %v107, 0.0
    %114 = vadd.xlane.f32.xlu0 %v113
    %v115 = vpop.xlane.xlu0 %114
    %v116 = vsel %vm97, %v109, 0.0
    %117 = vadd.xlane.f32.xlu0 %v116
    %v118 = vpop.xlane.xlu0 %117
    %v119 = vlog2.pop %v112
    %v120 = vmul.f32 %v119, 0.6931472
    %v121 = vlog2.pop %v115
    %v122 = vmul.f32 %v121, 0.6931472
    %v123 = vlog2.pop %v118
    %v124 = vmul.f32 %v123, 0.6931472
    %v125 = vld [vmem:[%s71] sm:$0xff]
    %v126 = vld [vmem:[%s71 + $0x8] sm:$0xff]
    %v127 = vld [vmem:[%s71 + $0x10] sm:$0xf]
    %128 = vset.pattern.permute.xlu0 0
    %129 = vperm.xlu0 %128, %v125
    %v130 = vpop.permute.xlu0 %129
    %131 = vset.pattern.permute.xlu0 0
    %132 = vperm.xlu0 %131, %v126
    %v133 = vpop.permute.xlu0 %132
    %134 = vset.pattern.permute.xlu0 0
    %135 = vperm.xlu0 %134, %v127
    %v136 = vpop.permute.xlu0 %135
    %vm137 = vcmp.eq.s32.totalorder %v89, %v130
    %vm138 = vcmp.eq.s32.totalorder %v89, %v133
    %vm139 = vcmp.eq.s32.totalorder %v89, %v136
    %v140 = vsel %vm137, 0.9, 0.011111111
    %v141 = vsel %vm138, 0.9, 0.011111111
    %v142 = vsel %vm139, 0.9, 0.011111111
    %v143 = vmul.f32 %v140, %v101
    %v144 = vmul.f32 %v141, %v102
    %v145 = vmul.f32 %v142, %v103
    %v146 = vsel %vm90, %v143, 0.0
    %147 = vadd.xlane.f32.xlu0 %v146
    %v148 = vpop.xlane.xlu0 %147
    %v149 = vsel %vm90, %v144, 0.0
    %150 = vadd.xlane.f32.xlu0 %v149
    %v151 = vpop.xlane.xlu0 %150
    %v152 = vsel %vm97, %v145, 0.0
    %153 = vadd.xlane.f32.xlu0 %v152
    %v154 = vpop.xlane.xlu0 %153
    %v155 = vsub.f32 %v120, %v148
    %v156 = vsub.f32 %v122, %v151
    %v157 = vsub.f32 %v124, %v154
    %v158 = vlaneseq
    %v159 = vshrl.u32 %v158, 7
    %v160 = vadd.s32 %v159, 8
    %v161 = vadd.s32 %v159, 16
    %s162 = sadd.s32 0, 0
    %s163 = smul.u32 %s162, 20
    %v164 = vstv %s163
    %v165 = vadd.s32 %v164, %v159
    %v166 = vadd.s32 %v164, %v160
    %v167 = vadd.s32 %v164, %v161
    %vm168 = vcmp.lt.s32.totalorder %v165, 20
    %vm169 = vcmp.lt.s32.totalorder %v166, 20
    %vm170 = vcmp.lt.s32.totalorder %v167, 20
    %v171 = vsel %vm168, %v155, 0.0
    %v172 = vsel %vm169, %v156, 0.0
    %v173 = vsel %vm170, %v157, 0.0
    %v174 = vld [vmem:[#allocation2] sm:$0xff]
    %v175 = vld [vmem:[#allocation2 + $0x8] sm:$0xff]
    %v176 = vld [vmem:[#allocation2 + $0x10] sm:$0xf]
    %v177 = vadd.f32 %v174, %v171
    %v178 = vadd.f32 %v175, %v172
    %v179 = vadd.f32 %v176, %v173
    %vm180 = vcmask 7168
    %181 = vst.msk [vmem:[#allocation2] sm:$0xff] %vm180, %v177
    %182 = vst.msk [vmem:[#allocation2 + $0x8] sm:$0xff] %vm180, %v178
    %vm183 = vcmask 3072
    %184 = vst.msk [vmem:[#allocation2 + $0x10] sm:$0xf] %vm183, %v179
    // Predicated region
    $region14: #{tpu_custom_call.1} parent=1 // pred_check
      %p185 = pneg %p76
    $region15: #{tpu_custom_call.1} parent=1 // pred_check_branch
      %187 = sbr.rel (%p185) target = $region17
    $region16: #{tpu_custom_call.1} parent=1 // pred_region
      %v188 = vld [vmem:[#allocation2] sm:$0xff]
      %v189 = vld [vmem:[#allocation2 + $0x8] sm:$0xff]
      %v190 = vld [vmem:[#allocation2 + $0x10] sm:$0xf]
      %v191 = vsel %vm180, %v188, 0.0
      %v192 = vsel %vm180, %v189, 0.0
      %v193 = vadd.f32 %v191, %v192
      %v194 = vsel %vm183, %v190, 0.0
      %v195 = vadd.f32 %v193, %v194
      %196 = vadd.xlane.f32.xlu0 %v195
      %v197 = vpop.xlane.xlu0 %196
      %v198 = vrot.slane %v197, 4
      %v199 = vadd.f32 %v197, %v198
      %v200 = vrot.slane %v199, 2
      %v201 = vadd.f32 %v199, %v200
      %v202 = vrot.slane %v201, 1
      %v203 = vadd.f32 %v201, %v202
      %s204 = vtos %v203
      %v205 = vstv %s204
      %v206 = vadd.f32 %v205, 0.0
      %207 = vst [vmem:[#allocation3] sm:$0xff] %v206
    $region17: #{tpu_custom_call.1} parent=1 // pred_fallthru
      _
    // Predicated region
    $region18: #{tpu_custom_call.1} parent=1 // pred_check
      _
    $region19: #{tpu_custom_call.1} parent=1 // pred_check_branch
      %209 = sbr.rel (0) target = $region21
    $region20: #{tpu_custom_call.1} parent=1 // pred_region
      %s211 = ssub.s32 128, 128
      %212 = vsyncadd [#allocation4], %s211
      %s214 = sshll.u32 [#allocation3], 4
      %s215 = int_to_ptr.vmem [resolvable:$true] %s214
      %217 = dma.vmem_to_hbm [thread:$0]  %s215, 128, %s2, [#allocation4]
    $region21: #{tpu_custom_call.1} parent=1 // pred_fallthru
      _
    // Predicated region
    $region22: #{tpu_custom_call.1} parent=1 // pred_check
      _
    $region23: #{tpu_custom_call.1} parent=1 // pred_check_branch
      %219 = sbr.rel (0) target = $region25
    $region24: #{tpu_custom_call.1} parent=1 // pred_region
      %220 = dma.done [#allocation4], 128
    $region25: #{tpu_custom_call.1} parent=1 // pred_fallthru
      _
    %221 = vsyncpa [#allocation4], 1

</llo_original>
